<compile_context>
chip_gen: v7x
topology: tpu7x:2x2x1
jax: 0.10.0
libtpu: 0.0.40
codegen_flags: <defaults>
</compile_context>

<pallas_src>
import math

import jax
import jax.numpy as jnp
from jax.experimental import pallas as pl
from jax.experimental.pallas import tpu as pltpu


# ----------------------------------------------------------------------------
# helpers
# ----------------------------------------------------------------------------
def _round_up(x, m):
    return ((x + m - 1) // m) * m


def _choose_tm(m, *, row_align=8, max_tm=512):
    """Row-tile size.

    Single grid step for modest M (per-grid-step overhead ~0.35us dominates at these sizes);
    only tile the row axis once a full `max_tm` block of real MXU/DMA work is available.
    `row_align` is 8 for f32, 16 for bf16 (sublane packing), 32 for int8/fp8.
    """
    tm = _round_up(max(m, 1), row_align)
    return min(tm, max_tm)


def make_sinusoidal_pe(max_len, d_model, dtype=jnp.float32):
    """Precomputed sinusoidal table, identical to PositionalEncoding.__init__."""
    position = jnp.arange(max_len, dtype=jnp.float32)[:, None]
    div_term = jnp.exp(
        jnp.arange(0, d_model, 2, dtype=jnp.float32) * (-math.log(10000.0) / d_model))
    pe = jnp.zeros((max_len, d_model), dtype=jnp.float32)
    pe = pe.at[:, 0::2].set(jnp.sin(position * div_term))
    pe = pe.at[:, 1::2].set(jnp.cos(position * div_term))
    return pe.astype(dtype)


# ----------------------------------------------------------------------------
# Kernel 1: fused POS-embedding gather + PositionalEncoding (eval: dropout == identity)
# ----------------------------------------------------------------------------
def _gather_pe_kernel(node_pos_ref, pos_row_ref, pe_row_ref, o_ref):
    # node_pos_ref: SMEM scalar-prefetch (N,) int32 — consumed by the index_map (row gather).
    # pos_row_ref : (1, E) gathered pos_embd row (Element-indexed by node_pos[i])
    # pe_row_ref  : (1, E) sinusoidal row i (windowed from the full max_len table)
    # o_ref       : (1, E)
    del node_pos_ref
    o_ref[...] = pos_row_ref[...] + pe_row_ref[...]


def _fused_gather_pos_encoding(node_pos, pos_table, pe):
    N = node_pos.shape[0]
    _, E = pos_table.shape
    return pl.pallas_call(
        _gather_pe_kernel,
        out_shape=jax.ShapeDtypeStruct((N, E), pos_table.dtype),
        grid_spec=pltpu.PrefetchScalarGridSpec(
            num_scalar_prefetch=1,
            grid=(N,),
            in_specs=[
                # POS-embedding row gather: element offset read from the prefetched node_pos.
                pl.BlockSpec((pl.Element(1), E), lambda i, node_pos: (node_pos[i], 0)),
                # PE row i, windowed straight out of the full (max_len, E) table.
                pl.BlockSpec((1, E), lambda i, node_pos: (i, 0)),
            ],
            out_specs=pl.BlockSpec((1, E), lambda i, node_pos: (i, 0)),
        ),
        compiler_params=pltpu.CompilerParams(dimension_semantics=("arbitrary",)),
    )(node_pos, pos_table, pe)


def _pos_encoding_add_kernel(x_ref, pe_ref, o_ref):
    o_ref[...] = x_ref[...] + pe_ref[...]


def _pos_encoding_add(x, pe):
    # x: (N, E); pe: full (max_len, E) table — the BlockSpec windows rows directly.
    N, E = x.shape
    tm = _choose_tm(N)
    return pl.pallas_call(
        _pos_encoding_add_kernel,
        out_shape=jax.ShapeDtypeStruct((N, E), x.dtype),
        grid_spec=pltpu.PrefetchScalarGridSpec(
            num_scalar_prefetch=0,
            grid=(pl.cdiv(N, tm),),
            in_specs=[pl.BlockSpec((tm, E), lambda i: (i, 0)),
                      pl.BlockSpec((tm, E), lambda i: (i, 0))],
            out_specs=pl.BlockSpec((tm, E), lambda i: (i, 0)),
        ),
        compiler_params=pltpu.CompilerParams(dimension_semantics=("arbitrary",)),
    )(x, pe)


def get_node_features_with_position(node_pos, pos_table, pe):
    """get_node_features (embedding gather) + PositionalEncoding.forward, one pallas_call."""
    N = node_pos.shape[0]
    assert pe.shape[0] >= N and pe.shape[1] == pos_table.shape[1]
    try:
        return _fused_gather_pos_encoding(node_pos, pos_table, pe)
    except Exception:
        # TODO(synk): pl.Element row-gather unsupported on this jax/Mosaic build — keep the
        # gather in XLA (jnp.take) and do the PE add in Pallas (still no wrapper pe slice).
        gathered = jnp.take(pos_table, node_pos, axis=0)
        return _pos_encoding_add(gathered, pe)


# ----------------------------------------------------------------------------
# Kernel 2: nn.Linear head  (y = [leaky_relu](x) @ W^T + b), lane-dense padded columns
# ----------------------------------------------------------------------------
def prepare_linear_params(weight, bias, *, lane_multiple=128):
    """One-time packing of nn.Linear params (hoisted out of the per-call path).

    weight: (out_features, in_features) torch layout; bias: (out_features,).
    Returns W^T zero-padded to a lane-multiple of output columns and a (1, N_pad) bias.
    """
    out_f, in_f = weight.shape
    n_pad = _round_up(out_f, lane_multiple)
    w_t = jnp.zeros((in_f, n_pad), weight.dtype).at[:, :out_f].set(weight.T)
    b = jnp.zeros((1, n_pad), bias.dtype).at[0, :out_f].set(bias)
    return w_t, b


def linear_forward(x, w_t_padded, b_padded, out_features, *, max_tm=512,
                   compute_dtype=None, pre_leaky_relu_slope=None):
    """Pallas y = x @ W^T + b for a pre-packed (transposed, lane-padded) weight.

    x: (..., K).  Returns (..., out_features) in x.dtype.
    pre_leaky_relu_slope: if not None, apply LeakyReLU(x) inside the kernel before the MXU
      (free VPU filler — fuses self.activation with the head).
    compute_dtype=jnp.bfloat16 casts x/W for MXU-input peak (valid on v5e/v6e/v7x); the
      accumulation and bias epilogue stay in f32.
    """
    orig_shape = x.shape
    K = orig_shape[-1]
    x2d = x.reshape(-1, K)
    M = x2d.shape[0]
    K_w, N_pad = w_t_padded.shape
    assert K_w == K and N_pad % 128 == 0

    out_dtype = x.dtype
    if compute_dtype is not None:
        x2d = x2d.astype(compute_dtype)
        w_t_padded = w_t_padded.astype(compute_dtype)

    in_bytes = jnp.dtype(x2d.dtype).itemsize
    out_bytes = jnp.dtype(out_dtype).itemsize

    row_align = 8 if in_bytes == 4 else (16 if in_bytes == 2 else 32)
    tm = _choose_tm(M, row_align=row_align, max_tm=max_tm)
    grid = (pl.cdiv(M, tm),)

    # VMEM working set: x / out tiles double-buffered by the pipeline, resident weight/bias
    # requested single-buffered (constant index_map). No extra 2x headroom; cap well below
    # v7x's 64 MiB so compiler-internal scratch still fits.
    resident = (K * N_pad + N_pad) * in_bytes
    streamed = 2 * (tm * K * in_bytes + tm * N_pad * out_bytes)
    vmem_limit = int(min(max(resident + streamed + (4 << 20), 16 << 20), 48 << 20))

    # Advisory cost with the *real* output width (not the 128-padded one).
    cost = pl.CostEstimate(
        flops=2 * M * K * out_features,
        transcendentals=0,
        bytes_accessed=(M * K * in_bytes + K * N_pad * in_bytes
                        + N_pad * in_bytes + M * out_features * out_bytes),
    )

    slope = pre_leaky_relu_slope

    def kernel(x_ref, wt_ref, b_ref, o_ref):
        xv = x_ref[...]
        if slope is not None:
            xv = jnp.where(xv >= 0, xv, xv * slope)          # fused LeakyReLU
        acc = jnp.dot(xv, wt_ref[...], preferred_element_type=jnp.float32)
        o_ref[...] = (acc + b_ref[...].astype(jnp.float32)).astype(o_ref.dtype)

    def call(single_buffer_resident):
        if single_buffer_resident:
            # Constant-index resident blocks: double-buffering them only wastes VMEM.
            w_spec = pl.BlockSpec((K, N_pad), lambda i: (0, 0),
                                  pipeline_mode=pl.Buffered(1))
            b_spec = pl.BlockSpec((1, N_pad), lambda i: (0, 0),
                                  pipeline_mode=pl.Buffered(1))
        else:
            w_spec = pl.BlockSpec((K, N_pad), lambda i: (0, 0))
            b_spec = pl.BlockSpec((1, N_pad), lambda i: (0, 0))
        return pl.pallas_call(
            kernel,
            out_shape=jax.ShapeDtypeStruct((M, N_pad), out_dtype),
            grid_spec=pltpu.PrefetchScalarGridSpec(
                num_scalar_prefetch=0,
                grid=grid,
                in_specs=[
                    pl.BlockSpec((tm, K), lambda i: (i, 0)),   # x row tile
                    w_spec,                                    # resident W^T (padded)
                    b_spec,                                    # bias row (padded)
                ],
                out_specs=pl.BlockSpec((tm, N_pad), lambda i: (i, 0)),
            ),
            compiler_params=pltpu.CompilerParams(
                # Single-step grids are not split across cores (overhead-bound loop).
                dimension_semantics=("arbitrary",) if grid[0] == 1 else ("parallel",),
                vmem_limit_bytes=vmem_limit,
            ),
            cost_estimate=cost,
        )(x2d, w_t_padded, b_padded)

    try:
        out2d = call(True)
    except Exception:
        # TODO(synk): pipeline_mode=pl.Buffered(1) unsupported on this jax — fall back to
        # default double-buffering of the resident weight (costs VMEM only, not correctness).
        out2d = call(False)

    out = out2d[:, :out_features]
    return out.reshape(orig_shape[:-1] + (out_features,))


# ----------------------------------------------------------------------------
# demo / correctness check
# ----------------------------------------------------------------------------
if __name__ == "__main__":
    # Small deterministic shapes consistent with the module:
    #   embd_dim=64 (module default), 24-node parse graph, slot_num=4,
    #   positional-encoding max_len=64, 32-entry POS-tag vocabulary (stand-in for POS_DICT_).
    embd_dim = 64
    num_pos_tags = 32
    num_nodes = 24
    slot_num = 4
    max_len = 64

    key = jax.random.PRNGKey(0)
    (k_tbl, k_tw, k_tb, k_ew, k_eb,
     k_pos, k_phr, k_h, k_slot, k_cp) = jax.random.split(key, 10)

    # ---- parameters (packed once, outside the per-call path) ----
    pos_table = jax.random.normal(k_tbl, (num_pos_tags, embd_dim), dtype=jnp.float32)
    pe = make_sinusoidal_pe(max_len, embd_dim)

    bound_t = 1.0 / math.sqrt(embd_dim)
    target_w = jax.random.uniform(k_tw, (1, embd_dim), minval=-bound_t, maxval=bound_t,
                                  dtype=jnp.float32)
    target_b = jax.random.uniform(k_tb, (1,), minval=-bound_t, maxval=bound_t,
                                  dtype=jnp.float32)
    bound_e = 1.0 / math.sqrt(2 * embd_dim)
    edge_w = jax.random.uniform(k_ew, (1, 2 * embd_dim), minval=-bound_e, maxval=bound_e,
                                dtype=jnp.float32)
    edge_b = jax.random.uniform(k_eb, (1,), minval=-bound_e, maxval=bound_e,
                                dtype=jnp.float32)

    # Combined hidden-head weight: column 0 = target_fn, column 1 = node half of edge_fn
    # (edge bias carried here; the slot half gets a zero bias so it is not double counted).
    hidden_head_w = jnp.concatenate([target_w, edge_w[:, embd_dim:]], axis=0)   # (2, E)
    hidden_head_b = jnp.concatenate([target_b, edge_b], axis=0)                 # (2,)
    hidden_head_wt, hidden_head_bp = prepare_linear_params(hidden_head_w, hidden_head_b)

    slot_head_wt, slot_head_bp = prepare_linear_params(edge_w[:, :embd_dim],
                                                       jnp.zeros_like(edge_b))

    # ---- inputs ----
    node_pos = jax.random.randint(k_pos, (num_nodes,), 0, num_pos_tags, dtype=jnp.int32)
    phrases = jax.random.normal(k_phr, (num_nodes, embd_dim), dtype=jnp.float32)

    # ---- forward ----
    # get_node_features (POS-embedding gather) + PositionalEncoding (dropout p=0.1 identity
    # in eval mode) — single fused Pallas launch.
    node_features = get_node_features_with_position(node_pos, pos_table, pe)    # (N, E)

    # TODO(synk): MPNN (self.gnn) and SlotAttention (self.context_att) have no reference
    # implementation in the spec; stand in with deterministic tensors of the right shapes
    # so the downstream Pallas heads are exercised faithfully.
    h = jax.random.normal(k_h, (num_nodes, embd_dim), dtype=jnp.float32)
    hidden_features = jax.nn.leaky_relu(h, negative_slope=0.01)   # self.activation (reference)
    w_c_embd = jax.random.normal(k_slot, (1, slot_num, embd_dim), dtype=jnp.float32)
    context_prob_k = jax.nn.softmax(
        jax.random.normal(k_cp, (1, slot_num, num_nodes), dtype=jnp.float32), axis=-1)

    # One MXU call: LeakyReLU fused, column 0 = target_fn, column 1 = edge node term.
    head_out = linear_forward(h, hidden_head_wt, hidden_head_bp, out_features=2,
                              pre_leaky_relu_slope=0.01)                        # (N, 2)
    target_score = head_out[:, 0:1]                                             # (N, 1)
    edge_node_term = head_out[:, 1:2]                                           # (N, 1) + bias
    target_prob = jax.nn.softmax(target_score, axis=0)

    # Edge head, slot term: w_c_embd @ W1^T (tiny Pallas matvec; bias already in node term).
    slot_term = linear_forward(w_c_embd[0], slot_head_wt, slot_head_bp,
                               out_features=1)                                   # (slot, 1)

    # Algebraic recombination replaces the (slot, N, 2E) broadcast+concat+matmul.
    edge_score = slot_term[:, None, :] + edge_node_term[None, :, :]              # (slot, N, 1)
    w_r_prob = jax.nn.softmax(edge_score, axis=1)

    # weighted phrase embeddings (plain JAX reductions, mirroring the torch code)
    w_t_embd = jnp.sum(phrases * target_prob, axis=0)                                   # (E,)
    w_c_out = jnp.sum(phrases[None, :, :] * context_prob_k[0][:, :, None], axis=1)      # (slot, E)
    w_r_out = jnp.sum(phrases[None, :, :] * w_r_prob[:, :, 0][:, :, None], axis=1)      # (slot, E)

    for t in (node_features, target_score, edge_score, w_t_embd, w_c_out, w_r_out):
        jax.block_until_ready(t)

    # ---- correctness checks against plain-JAX references ----
    ref_node_features = pos_table[node_pos] + pe[:num_nodes]
    assert node_features.shape == (num_nodes, embd_dim)
    assert jnp.allclose(node_features, ref_node_features, atol=1e-5, rtol=1e-5)

    ref_target = hidden_features @ target_w.T + target_b
    assert target_score.shape == (num_nodes, 1)
    assert jnp.allclose(target_score, ref_target, atol=1e-4, rtol=1e-4)

    wc = jnp.broadcast_to(jnp.transpose(w_c_embd, (1, 0, 2)),
                          (slot_num, num_nodes, embd_dim))
    hf = jnp.broadcast_to(hidden_features[None, :, :],
                          (slot_num, num_nodes, embd_dim))
    ref_edge = jnp.concatenate([wc, hf], axis=-1) @ edge_w.T + edge_b
    assert edge_score.shape == (slot_num, num_nodes, 1)
    assert jnp.allclose(edge_score, ref_edge, atol=1e-4, rtol=1e-4)

    assert w_t_embd.shape == (embd_dim,)
    assert w_c_out.shape == (slot_num, embd_dim)
    assert w_r_out.shape == (slot_num, embd_dim)

    print("KERNEL_OK")
</pallas_src>

<mosaic_0001>
module attributes {stable_mosaic.version = 11 : i64} {
  func.func @_pos_encoding_add_kernel(%arg0: i32, %arg1: memref<24x64xf32, #tpu.memory_space<vmem>>, %arg2: memref<24x64xf32, #tpu.memory_space<vmem>>, %arg3: memref<24x64xf32, #tpu.memory_space<vmem>>) attributes {dimension_semantics = [#tpu.dimension_semantics<arbitrary>], iteration_bounds = array<i64: 1>, scalar_prefetch = 0 : i64, scratch_operands = 0 : i64, tpu.core_type = #tpu.core_type<tc>, window_params = [{transform_indices = @transform_0, window_bounds = array<i64: 24, 64>}, {transform_indices = @transform_1, window_bounds = array<i64: 24, 64>}, {transform_indices = @transform_2, window_bounds = array<i64: 24, 64>}]} {
    %c0 = arith.constant 0 : index
    %c0_0 = arith.constant 0 : index
    %0 = vector.load %arg1[%c0, %c0_0] : memref<24x64xf32, #tpu.memory_space<vmem>>, vector<24x64xf32>
    %c0_1 = arith.constant 0 : index
    %c0_2 = arith.constant 0 : index
    %1 = vector.load %arg2[%c0_1, %c0_2] : memref<24x64xf32, #tpu.memory_space<vmem>>, vector<24x64xf32>
    %2 = arith.addf %0, %1 : vector<24x64xf32>
    %c0_3 = arith.constant 0 : index
    %c0_4 = arith.constant 0 : index
    %3 = vector.load %arg3[%c0_3, %c0_4] : memref<24x64xf32, #tpu.memory_space<vmem>>, vector<24x64xf32>
    tpu.vector_store %arg3[%c0_3, %c0_4], %2 {strides = array<i32>} : memref<24x64xf32, #tpu.memory_space<vmem>>, vector<24x64xf32>,
    return
  }
  func.func @transform_0(%arg0: i32) -> (i32, i32) {
    %c0_i32 = arith.constant 0 : i32
    %c0_i32_0 = arith.constant 0 : i32
    return %arg0, %c0_i32 : i32, i32
  }
  func.func @transform_1(%arg0: i32) -> (i32, i32) {
    %c0_i32 = arith.constant 0 : i32
    %c0_i32_0 = arith.constant 0 : i32
    return %arg0, %c0_i32 : i32, i32
  }
  func.func @transform_2(%arg0: i32) -> (i32, i32) {
    %c0_i32 = arith.constant 0 : i32
    %c0_i32_0 = arith.constant 0 : i32
    return %arg0, %c0_i32 : i32, i32
  }
}

</mosaic_0001>

<llo_original>
// kernel: tpu_custom_call.1
$region0: #{tpu_custom_call.1}
  #allocation0 [shape = 'u32[]', space=smem, size = 0x4, offset = 0x4, fixed_abs, tag = 'smem constant byte address 0x4 - core index']
  #allocation1 [shape = 'u32[144,128]{1,0:T(1,128)}', space=vmem, size = 0x12000, scoped, tag = 'internal scratch']
  %s0 = inlined_call_operand.hbm [shape: f32[24,64], index: 0, kind: input, shape index: {}]
  %s1 = inlined_call_operand.hbm [shape: f32[64,64], index: 1, kind: input, shape index: {}]
  %s2 = inlined_call_operand.hbm [shape: f32[24,64], index: 2, kind: output, shape index: {}]
  %s3 = sld [smem:[#allocation0]]
  $region26: #{tpu_custom_call.1} parent=0
    _
  %s5 = ssub.s32 1, %s3
  %s6 = scalar_select 0, %s5, %s3
  $region1: #{tpu_custom_call.1} parent=0
    #allocation2 [shape = 'u8[12288]{0}', space=vmem, size = 0x3000, scoped, tag = 'input window, operand 0, single buffered']
    #allocation3 [shape = 's32[1]{0}', space=sflag, size = 0x4, scoped, tag = 'scoped memory for tpu_custom_call.1']
    #allocation4 [shape = 's32[1]{0}', space=sflag, size = 0x4, scoped, tag = 'scoped memory for tpu_custom_call.1']
    #allocation5 [shape = 'u8[12288]{0}', space=vmem, size = 0x3000, scoped, tag = 'input window, operand 1, single buffered']
    #allocation6 [shape = 's32[1]{0}', space=sflag, size = 0x4, scoped, tag = 'scoped memory for tpu_custom_call.1']
    #allocation7 [shape = 'u8[12288]{0}', space=vmem, size = 0x3000, scoped, tag = 'output window, operand 0, single buffered']
    %7 = vsyncpa [#allocation3], 0
    %8 = vsyncpa [#allocation6], 0
    %9 = vsyncpa [#allocation4], 0
    // Predicated region
    $region2: #{tpu_custom_call.1} parent=1 // pred_check
      _
    $region3: #{tpu_custom_call.1} parent=1 // pred_check_branch
      %11 = sbr.rel (0) target = $region5
    $region4: #{tpu_custom_call.1} parent=1 // pred_region
      %s13 = ssub.s32 384, 384
      %14 = vsyncadd [#allocation3], %s13
      %s15 = sshll.u32 [#allocation2], 4
      %s16 = int_to_ptr.vmem [resolvable:$true] %s15
      %21 = dma.hbm_to_vmem [thread:$0]  %s0, 384, %s16, [#allocation3], 128, 128, 8
    $region5: #{tpu_custom_call.1} parent=1 // pred_fallthru
      _
    // Predicated region
    $region6: #{tpu_custom_call.1} parent=1 // pred_check
      _
    $region7: #{tpu_custom_call.1} parent=1 // pred_check_branch
      %23 = sbr.rel (0) target = $region9
    $region8: #{tpu_custom_call.1} parent=1 // pred_region
      %s25 = ssub.s32 384, 384
      %26 = vsyncadd [#allocation6], %s25
      %s27 = sshll.u32 [#allocation5], 4
      %s28 = int_to_ptr.vmem [resolvable:$true] %s27
      %33 = dma.hbm_to_vmem [thread:$0]  %s1, 384, %s28, [#allocation6], 128, 128, 8
    $region9: #{tpu_custom_call.1} parent=1 // pred_fallthru
      _
    // Predicated region
    $region10: #{tpu_custom_call.1} parent=1 // pred_check
      _
    $region11: #{tpu_custom_call.1} parent=1 // pred_check_branch
      %35 = sbr.rel (0) target = $region13
    $region12: #{tpu_custom_call.1} parent=1 // pred_region
      %36 = dma.done [#allocation3], 384
    $region13: #{tpu_custom_call.1} parent=1 // pred_fallthru
      _
    // Predicated region
    $region14: #{tpu_custom_call.1} parent=1 // pred_check
      _
    $region15: #{tpu_custom_call.1} parent=1 // pred_check_branch
      %38 = sbr.rel (0) target = $region17
    $region16: #{tpu_custom_call.1} parent=1 // pred_region
      %39 = dma.done [#allocation6], 384
    $region17: #{tpu_custom_call.1} parent=1 // pred_fallthru
      _
    %v40 = vld [vmem:[#allocation2] sm:$0xff]
    %v41 = vld [vmem:[#allocation2 + $0x8] sm:$0xff]
    %v42 = vld [vmem:[#allocation2 + $0x10] sm:$0xff]
    %v43 = vld [vmem:[#allocation5] sm:$0xff]
    %v44 = vld [vmem:[#allocation5 + $0x8] sm:$0xff]
    %v45 = vld [vmem:[#allocation5 + $0x10] sm:$0xff]
    %v46 = vadd.f32 %v40, %v43
    %v47 = vadd.f32 %v41, %v44
    %v48 = vadd.f32 %v42, %v45
    %vm49 = vcmask 523264
    %50 = vst.msk [vmem:[#allocation7] sm:$0xff] %vm49, %v46
    %51 = vst.msk [vmem:[#allocation7 + $0x8] sm:$0xff] %vm49, %v47
    %52 = vst.msk [vmem:[#allocation7 + $0x10] sm:$0xff] %vm49, %v48
    // Predicated region
    $region18: #{tpu_custom_call.1} parent=1 // pred_check
      _
    $region19: #{tpu_custom_call.1} parent=1 // pred_check_branch
      %54 = sbr.rel (0) target = $region21
    $region20: #{tpu_custom_call.1} parent=1 // pred_region
      %s56 = ssub.s32 384, 384
      %57 = vsyncadd [#allocation4], %s56
      %s58 = sshll.u32 [#allocation7], 4
      %s59 = int_to_ptr.vmem [resolvable:$true] %s58
      %64 = dma.vmem_to_hbm [thread:$0]  %s59, 384, %s2, [#allocation4], 128, 128, 8
    $region21: #{tpu_custom_call.1} parent=1 // pred_fallthru
      _
    // Predicated region
    $region22: #{tpu_custom_call.1} parent=1 // pred_check
      _
    $region23: #{tpu_custom_call.1} parent=1 // pred_check_branch
      %66 = sbr.rel (0) target = $region25
    $region24: #{tpu_custom_call.1} parent=1 // pred_region
      %67 = dma.done [#allocation4], 384
    $region25: #{tpu_custom_call.1} parent=1 // pred_fallthru
      _
    %68 = vsyncpa [#allocation3], 1
    %69 = vsyncpa [#allocation6], 1
    %70 = vsyncpa [#allocation4], 1

</llo_original>
